<compile_context>
chip_gen: v7x
topology: tpu7x:2x2x1
jax: 0.10.0
libtpu: 0.0.40
codegen_flags: <defaults>
</compile_context>

<pallas_src>
import functools

import jax
import jax.numpy as jnp
from jax.experimental import pallas as pl
from jax.experimental.pallas import tpu as pltpu

BN_EPS = 1e-5


def _round_up(x, m):
    return (x + m - 1) // m * m


def _pick_div_tile(total, cap, quantum=128):
    """Largest multiple of `quantum` that divides `total` and is <= cap."""
    best = quantum
    d = quantum
    while d <= min(total, cap):
        if total % d == 0:
            best = d
        d += quantum
    return best


# --------------------------------------------------------------------------------
# Kernels
# --------------------------------------------------------------------------------
def _conv_relu_stats_kernel(x_ref, w_ref, b_ref, y_ref, s_ref, ss_ref, acc_ref,
                            *, tm, m_valid):
    """One (tm, tn) tile of relu(patches @ w + b), accumulated over the K grid axis.

    At the last K step the tile is stored (bf16) and per-channel sum / sum-of-squares
    partials (rows >= m_valid masked out) are emitted for the BatchNorm batch stats.
    All pl.program_id / pl.num_programs calls stay at the kernel top level.
    """
    k = pl.program_id(2)
    k_last = pl.num_programs(2) - 1
    m_blk = pl.program_id(0)            # hoisted: never call pl.* inside pl.when

    @pl.when(k == 0)
    def _init():
        acc_ref[...] = jnp.zeros_like(acc_ref)

    acc_ref[...] += jnp.dot(x_ref[...], w_ref[...],
                            preferred_element_type=jnp.float32)

    @pl.when(k == k_last)
    def _finalize():
        y = jnp.maximum(acc_ref[...] + b_ref[...], 0.0)     # bias + ReLU, f32 epilogue
        y_ref[...] = y.astype(y_ref.dtype)                  # bf16 intermediate store
        row = m_blk * tm + jax.lax.broadcasted_iota(jnp.int32, (tm, 1), 0)
        valid = (row < m_valid).astype(jnp.float32)         # mask padded M rows
        ym = y * valid
        # TODO(synk): switch to per-tile Welford (count, mean, M2) partials if this
        # layer is ever run with very large N*Ho*Wo (E[x^2]-mean^2 cancellation).
        s_ref[0] = jnp.sum(ym, axis=0, keepdims=True)
        ss_ref[0] = jnp.sum(ym * ym, axis=0, keepdims=True)


def _bn_affine_kernel(y_ref, scale_ref, shift_ref, o_ref):
    """o = y * scale + shift on an (tm, tn) tile (row-major fallback path)."""
    o_ref[...] = y_ref[...].astype(jnp.float32) * scale_ref[...] + shift_ref[...]


def _bn_affine_chw_kernel(y_ref, scale_ref, shift_ref, o_ref):
    """Fused BN affine + in-kernel tile transpose -> channel-major output block."""
    y = y_ref[...].astype(jnp.float32)                      # (hw, tn)
    z = y * scale_ref[...] + shift_ref[...]
    o_ref[0] = z.T                                          # (tn, hw) via XLU


# --------------------------------------------------------------------------------
# pallas_call wrappers
# --------------------------------------------------------------------------------
def _conv_relu_stats(patches, wm, bias, m_valid, tm, tn, tk):
    Mp, Kp = patches.shape
    Cp = wm.shape[1]
    gm, gn, gk = Mp // tm, Cp // tn, Kp // tk

    # Explicit VMEM budget (double-buffered ins/outs + single f32 accumulator).
    tile_bytes = (2 * (tm * tk * 2)      # lhs patches, bf16
                  + 2 * (tk * tn * 2)    # rhs weights, bf16
                  + 2 * (tn * 4)         # bias, f32
                  + 2 * (tm * tn * 2)    # y out, bf16
                  + 4 * (tn * 4)         # sum / sumsq partials, f32
                  + tm * tn * 4)         # accumulator scratch, f32
    # Clamp to [32 MiB, 56 MiB]: plenty for these tiles, and always leaves >= 8 MiB
    # headroom under v7x's 64 MiB-per-core physical VMEM.
    vmem_limit = int(min(56 * 2**20, max(32 * 2**20, tile_bytes + (8 << 20))))

    kernel = functools.partial(_conv_relu_stats_kernel, tm=tm, m_valid=m_valid)
    return pl.pallas_call(
        kernel,
        out_shape=(
            jax.ShapeDtypeStruct((Mp, Cp), jnp.bfloat16),
            jax.ShapeDtypeStruct((gm, 1, Cp), jnp.float32),
            jax.ShapeDtypeStruct((gm, 1, Cp), jnp.float32),
        ),
        grid_spec=pltpu.PrefetchScalarGridSpec(
            num_scalar_prefetch=0,
            grid=(gm, gn, gk),
            in_specs=[
                pl.BlockSpec((tm, tk), lambda m, n, k: (m, k)),
                pl.BlockSpec((tk, tn), lambda m, n, k: (k, n)),
                pl.BlockSpec((1, tn), lambda m, n, k: (0, n)),
            ],
            out_specs=[
                pl.BlockSpec((tm, tn), lambda m, n, k: (m, n)),
                pl.BlockSpec((1, 1, tn), lambda m, n, k: (m, 0, n)),
                pl.BlockSpec((1, 1, tn), lambda m, n, k: (m, 0, n)),
            ],
            scratch_shapes=[pltpu.VMEM((tm, tn), jnp.float32)],
        ),
        compiler_params=pltpu.CompilerParams(
            dimension_semantics=("parallel", "parallel", "arbitrary"),
            vmem_limit_bytes=vmem_limit,
        ),
    )(patches, wm, bias)


def _bn_affine_rowmajor(y, scale, shift, tm, tn):
    """Fallback pass 2: (Mp, Cp) f32 output (needs an XLA transpose afterwards)."""
    Mp, Cp = y.shape
    gm, gn = Mp // tm, Cp // tn
    return pl.pallas_call(
        _bn_affine_kernel,
        out_shape=jax.ShapeDtypeStruct((Mp, Cp), jnp.float32),
        grid_spec=pltpu.PrefetchScalarGridSpec(
            num_scalar_prefetch=0,
            grid=(gm, gn),
            in_specs=[
                pl.BlockSpec((tm, tn), lambda m, n: (m, n)),
                pl.BlockSpec((1, tn), lambda m, n: (0, n)),
                pl.BlockSpec((1, tn), lambda m, n: (0, n)),
            ],
            out_specs=pl.BlockSpec((tm, tn), lambda m, n: (m, n)),
        ),
        compiler_params=pltpu.CompilerParams(
            dimension_semantics=("parallel", "parallel"),
        ),
    )(y, scale, shift)


def _bn_affine_chw(y, scale, shift, n_img, hw, tn2):
    """Fast pass 2: per-image (hw, tn2) tiles of y, transposed in-kernel and written
    to a channel-major (N, Cp, hw) output -> no standalone NHWC->NCHW transpose."""
    _, Cp = y.shape
    gn = Cp // tn2
    return pl.pallas_call(
        _bn_affine_chw_kernel,
        out_shape=jax.ShapeDtypeStruct((n_img, Cp, hw), jnp.float32),
        grid_spec=pltpu.PrefetchScalarGridSpec(
            num_scalar_prefetch=0,
            grid=(n_img, gn),
            in_specs=[
                pl.BlockSpec((hw, tn2), lambda n, c: (n, c)),
                pl.BlockSpec((1, tn2), lambda n, c: (0, c)),
                pl.BlockSpec((1, tn2), lambda n, c: (0, c)),
            ],
            out_specs=pl.BlockSpec((1, tn2, hw), lambda n, c: (n, c, 0)),
        ),
        compiler_params=pltpu.CompilerParams(
            dimension_semantics=("parallel", "parallel"),
        ),
    )(y, scale, shift)


# --------------------------------------------------------------------------------
# conv_bn2 forward
# --------------------------------------------------------------------------------
def conv_bn2_forward(x_nchw, weight, bias, gamma, beta, eps=BN_EPS):
    """PyTorch conv_bn2.forward: Conv2d(3x3, s=2, p=1) -> ReLU -> BatchNorm2d
    (training mode: normalize with per-channel batch mean / biased variance)."""
    N, Cin, H, W = x_nchw.shape
    Cout = weight.shape[0]
    Ho = (H + 2 - 3) // 2 + 1
    Wo = (W + 2 - 3) // 2 + 1
    HoWo = Ho * Wo

    M = N * HoWo
    K = 9 * Cin

    # ---- tile selection ----------------------------------------------------
    Kp = _round_up(K, 128)                     # pad K only to the lane quantum
    tk = _pick_div_tile(Kp, 1024)              # tk divides Kp -> no zero K block
    tn = min(1024, _round_up(Cout, 128))
    Cp = _round_up(Cout, tn)                   # tn always divides Cp (covers all ch)
    tm = min(1024, _round_up(M, 16))           # bf16 sublane packing: mult of 16
    gn = Cp // tn
    if (-(-M // tm)) * gn < 2 and M >= 32:     # give v7x's 2nd TensorCore work
        tm = _round_up(-(-M // 2), 16)
    Mp = _round_up(M, tm)

    # ---- im2col (plain-JAX glue; padding folded into the construction) ------
    # TODO(synk): fuse this 9-tap stride-2 gather into the conv kernel via manual DMA.
    x = jnp.transpose(x_nchw, (0, 2, 3, 1)).astype(jnp.bfloat16)   # NCHW -> NHWC
    xp = jnp.pad(x, ((0, 0), (1, 1), (1, 1), (0, 0)))
    cols = [xp[:, dy:dy + 2 * (Ho - 1) + 1:2, dx:dx + 2 * (Wo - 1) + 1:2, :]
            for dy in range(3) for dx in range(3)]
    if Kp > K:
        cols.append(jnp.zeros((N, Ho, Wo, Kp - K), jnp.bfloat16))
    patches = jnp.concatenate(cols, axis=-1).reshape(M, Kp)
    if Mp > M:
        patches = jnp.concatenate(
            [patches, jnp.zeros((Mp - M, Kp), jnp.bfloat16)], axis=0)

    # Weight (Cout, Cin, 3, 3) -> (9*Cin, Cout), matching im2col (dy, dx, ci) order.
    wm = jnp.transpose(weight, (2, 3, 1, 0)).reshape(K, Cout).astype(jnp.bfloat16)
    wm = jnp.pad(wm, ((0, Kp - K), (0, Cp - Cout)))
    b_pad = jnp.pad(bias.astype(jnp.float32), (0, Cp - Cout)).reshape(1, Cp)

    # ---- pass 1: conv-as-matmul + bias + ReLU + streaming BN stat partials ---
    y, s_part, ss_part = _conv_relu_stats(patches, wm, b_pad, M, tm, tn, tk)

    # ---- tiny cross-tile reduction -> batch mean / biased variance ----------
    count = jnp.float32(M)
    ch_sum = jnp.sum(s_part, axis=(0, 1))
    ch_sq = jnp.sum(ss_part, axis=(0, 1))
    mean = ch_sum / count
    var = jnp.maximum(ch_sq / count - mean * mean, 0.0)
    inv_std = jax.lax.rsqrt(var + eps)
    g_pad = jnp.pad(gamma.astype(jnp.float32), (0, Cp - Cout), constant_values=1.0)
    bt_pad = jnp.pad(beta.astype(jnp.float32), (0, Cp - Cout))
    scale = (g_pad * inv_std).reshape(1, Cp)
    shift = (bt_pad - mean * g_pad * inv_std).reshape(1, Cp)

    # ---- pass 2: fused normalize (scale/shift) -------------------------------
    # Fast path: emit channel-major (N, Cp, Ho*Wo) directly (in-kernel tile
    # transpose) so no standalone NHWC->NCHW transpose round-trips HBM.
    fast = (HoWo % 8 == 0) and (12 * HoWo * 128 <= 24 * 2**20)
    if fast:
        tn2 = 128
        d = 128
        while d <= min(Cp, 1024):
            if Cp % d == 0 and 12 * HoWo * d <= 24 * 2**20:
                tn2 = d
            d += 128
        out = _bn_affine_chw(y, scale, shift, N, HoWo, tn2)     # (N, Cp, Ho*Wo)
        out = out[:, :Cout, :].reshape(N, Cout, Ho, Wo)
    else:
        out = _bn_affine_rowmajor(y, scale, shift, tm, tn)      # (Mp, Cp)
        out = out[:M, :Cout].reshape(N, Ho, Wo, Cout)
        out = jnp.transpose(out, (0, 3, 1, 2))                  # NHWC -> NCHW
    return out


# --------------------------------------------------------------------------------
# Pure-JAX reference (for correctness check only)
# --------------------------------------------------------------------------------
def _conv_bn2_reference(x, w, b, gamma, beta, eps=BN_EPS):
    y = jax.lax.conv_general_dilated(
        x, w, window_strides=(2, 2), padding=((1, 1), (1, 1)),
        dimension_numbers=("NCHW", "OIHW", "NCHW"))
    y = y + b.reshape(1, -1, 1, 1)
    y = jnp.maximum(y, 0.0)
    mean = jnp.mean(y, axis=(0, 2, 3), keepdims=True)
    var = jnp.mean((y - mean) ** 2, axis=(0, 2, 3), keepdims=True)
    y = (y - mean) * jax.lax.rsqrt(var + eps)
    return y * gamma.reshape(1, -1, 1, 1) + beta.reshape(1, -1, 1, 1)


if __name__ == "__main__":
    key = jax.random.PRNGKey(0)
    kx, kw, kb = jax.random.split(key, 3)
    N, Cin, H, W = 2, 4, 16, 16
    Cout = 32

    x = jax.random.normal(kx, (N, Cin, H, W), jnp.float32)
    fan_in = Cin * 9
    weight = jax.random.normal(kw, (Cout, Cin, 3, 3), jnp.float32) / jnp.sqrt(fan_in)
    bias = jax.random.normal(kb, (Cout,), jnp.float32) * 0.1
    gamma = jnp.ones((Cout,), jnp.float32)   # fresh BatchNorm2d affine params
    beta = jnp.zeros((Cout,), jnp.float32)

    fwd = jax.jit(conv_bn2_forward)
    out = jax.block_until_ready(fwd(x, weight, bias, gamma, beta))

    assert out.shape == (N, Cout, H // 2, W // 2), out.shape
    assert bool(jnp.all(jnp.isfinite(out)))

    ref = _conv_bn2_reference(x, weight, bias, gamma, beta)
    # bf16 MXU operands / bf16 y intermediate vs. the all-f32 reference.
    assert bool(jnp.allclose(out, ref, atol=1e-1, rtol=1e-1)), \
        float(jnp.max(jnp.abs(out - ref)))

    print("KERNEL_OK")
</pallas_src>

<mosaic_0001>
module attributes {stable_mosaic.version = 11 : i64} {
  func.func @_conv_relu_stats_kernel(%arg0: i32, %arg1: i32, %arg2: i32, %arg3: memref<64x128xbf16, #tpu.memory_space<vmem>>, %arg4: memref<128x128xbf16, #tpu.memory_space<vmem>>, %arg5: memref<1x128xf32, #tpu.memory_space<vmem>>, %arg6: memref<64x128xbf16, #tpu.memory_space<vmem>>, %arg7: memref<1x1x128xf32, #tpu.memory_space<vmem>>, %arg8: memref<1x1x128xf32, #tpu.memory_space<vmem>>, %arg9: memref<64x128xf32, #tpu.memory_space<vmem>>) attributes {dimension_semantics = [#tpu.dimension_semantics<parallel>, #tpu.dimension_semantics<parallel>, #tpu.dimension_semantics<arbitrary>], iteration_bounds = array<i64: 2, 1, 1>, scalar_prefetch = 0 : i64, scratch_operands = 1 : i64, tpu.core_type = #tpu.core_type<tc>, window_params = [{transform_indices = @transform_0, window_bounds = array<i64: 64, 128>}, {transform_indices = @transform_1, window_bounds = array<i64: 128, 128>}, {transform_indices = @transform_2, window_bounds = array<i64: 1, 128>}, {transform_indices = @transform_3, window_bounds = array<i64: 64, 128>}, {transform_indices = @transform_4, window_bounds = array<i64: 1, 1, 128>}, {transform_indices = @transform_5, window_bounds = array<i64: 1, 1, 128>}]} {
    %c0_i32 = arith.constant 0 : i32
    %0 = arith.cmpi eq, %arg2, %c0_i32 : i32
    %1 = arith.extui %0 : i1 to i32
    %c0_i32_0 = arith.constant 0 : i32
    %2 = arith.cmpi ne, %1, %c0_i32_0 : i32
    scf.if %2 {
      %cst_10 = arith.constant 0.000000e+00 : f32
      %12 = vector.broadcast %cst_10 : f32 to vector<64x128xf32>
      %c0_11 = arith.constant 0 : index
      %c0_12 = arith.constant 0 : index
      %13 = vector.load %arg9[%c0_11, %c0_12] : memref<64x128xf32, #tpu.memory_space<vmem>>, vector<64x128xf32>
      tpu.vector_store %arg9[%c0_11, %c0_12], %12 {strides = array<i32>} : memref<64x128xf32, #tpu.memory_space<vmem>>, vector<64x128xf32>,
    } else {
    }
    %c0 = arith.constant 0 : index
    %c0_1 = arith.constant 0 : index
    %3 = vector.load %arg9[%c0, %c0_1] : memref<64x128xf32, #tpu.memory_space<vmem>>, vector<64x128xf32>
    %c0_2 = arith.constant 0 : index
    %c0_3 = arith.constant 0 : index
    %4 = vector.load %arg3[%c0_2, %c0_3] : memref<64x128xbf16, #tpu.memory_space<vmem>>, vector<64x128xbf16>
    %c0_4 = arith.constant 0 : index
    %c0_5 = arith.constant 0 : index
    %5 = vector.load %arg4[%c0_4, %c0_5] : memref<128x128xbf16, #tpu.memory_space<vmem>>, vector<128x128xbf16>
    %cst = arith.constant dense<0.000000e+00> : vector<64x128xf32>
    %6 = tpu.matmul %4, %5, %cst {dimension_numbers = #tpu.dot_dimension_numbers<[1], [0], [0], [1], [0, 0, 1, 1], [], []>} : vector<64x128xbf16>, vector<128x128xbf16>, vector<64x128xf32> -> vector<64x128xf32>
    %7 = arith.addf %3, %6 : vector<64x128xf32>
    %c0_6 = arith.constant 0 : index
    %c0_7 = arith.constant 0 : index
    %8 = vector.load %arg9[%c0_6, %c0_7] : memref<64x128xf32, #tpu.memory_space<vmem>>, vector<64x128xf32>
    tpu.vector_store %arg9[%c0_6, %c0_7], %7 {strides = array<i32>} : memref<64x128xf32, #tpu.memory_space<vmem>>, vector<64x128xf32>,
    %c0_i32_8 = arith.constant 0 : i32
    %9 = arith.cmpi eq, %arg2, %c0_i32_8 : i32
    %10 = arith.extui %9 : i1 to i32
    %c0_i32_9 = arith.constant 0 : i32
    %11 = arith.cmpi ne, %10, %c0_i32_9 : i32
    scf.if %11 {
      %c0_10 = arith.constant 0 : index
      %c0_11 = arith.constant 0 : index
      %12 = vector.load %arg9[%c0_10, %c0_11] : memref<64x128xf32, #tpu.memory_space<vmem>>, vector<64x128xf32>
      %c0_12 = arith.constant 0 : index
      %c0_13 = arith.constant 0 : index
      %13 = vector.load %arg5[%c0_12, %c0_13] : memref<1x128xf32, #tpu.memory_space<vmem>>, vector<1x128xf32>
      %14 = vector.broadcast %13 : vector<1x128xf32> to vector<64x128xf32>
      %15 = arith.addf %12, %14 : vector<64x128xf32>
      %cst_14 = arith.constant 0.000000e+00 : f32
      %16 = vector.broadcast %cst_14 : f32 to vector<64x128xf32>
      %17 = arith.maximumf %15, %16 : vector<64x128xf32>
      %18 = arith.truncf %17 : vector<64x128xf32> to vector<64x128xbf16>
      %c0_15 = arith.constant 0 : index
      %c0_16 = arith.constant 0 : index
      %19 = vector.load %arg6[%c0_15, %c0_16] : memref<64x128xbf16, #tpu.memory_space<vmem>>, vector<64x128xbf16>
      tpu.vector_store %arg6[%c0_15, %c0_16], %18 {strides = array<i32>} : memref<64x128xbf16, #tpu.memory_space<vmem>>, vector<64x128xbf16>,
      %c64_i32 = arith.constant 64 : i32
      %20 = arith.muli %arg0, %c64_i32 : i32
      %21 = tpu.iota {dimensions = array<i32: 0>} : vector<64x1xi32>
      %22 = vector.broadcast %20 : i32 to vector<64x1xi32>
      %23 = arith.addi %22, %21 : vector<64x1xi32>
      %c128_i32 = arith.constant 128 : i32
      %24 = vector.broadcast %c128_i32 : i32 to vector<64x1xi32>
      %25 = arith.cmpi slt, %23, %24 : vector<64x1xi32>
      %26 = arith.extui %25 : vector<64x1xi1> to vector<64x1xi32>
      %27 = arith.sitofp %26 : vector<64x1xi32> to vector<64x1xf32>
      %28 = vector.broadcast %27 : vector<64x1xf32> to vector<64x128xf32>
      %29 = arith.mulf %17, %28 : vector<64x128xf32>
      %cst_17 = arith.constant dense<0.000000e+00> : vector<128xf32>
      %30 = vector.multi_reduction <add>, %29, %cst_17 [0] : vector<64x128xf32> to vector<128xf32>
      %31 = vector.shape_cast %30 : vector<128xf32> to vector<1x128xf32>
      %c0_18 = arith.constant 0 : index
      %c0_19 = arith.constant 0 : index
      %c0_20 = arith.constant 0 : index
      %32 = vector.load %arg7[%c0_18, %c0_19, %c0_20] : memref<1x1x128xf32, #tpu.memory_space<vmem>>, vector<1x1x128xf32>
      %33 = vector.shape_cast %32 : vector<1x1x128xf32> to vector<1x128xf32>
      %34 = vector.shape_cast %31 : vector<1x128xf32> to vector<1x1x128xf32>
      tpu.vector_store %arg7[%c0_18, %c0_19, %c0_20], %34 {strides = array<i32>} : memref<1x1x128xf32, #tpu.memory_space<vmem>>, vector<1x1x128xf32>,
      %35 = arith.mulf %29, %29 : vector<64x128xf32>
      %cst_21 = arith.constant dense<0.000000e+00> : vector<128xf32>
      %36 = vector.multi_reduction <add>, %35, %cst_21 [0] : vector<64x128xf32> to vector<128xf32>
      %37 = vector.shape_cast %36 : vector<128xf32> to vector<1x128xf32>
      %c0_22 = arith.constant 0 : index
      %c0_23 = arith.constant 0 : index
      %c0_24 = arith.constant 0 : index
      %38 = vector.load %arg8[%c0_22, %c0_23, %c0_24] : memref<1x1x128xf32, #tpu.memory_space<vmem>>, vector<1x1x128xf32>
      %39 = vector.shape_cast %38 : vector<1x1x128xf32> to vector<1x128xf32>
      %40 = vector.shape_cast %37 : vector<1x128xf32> to vector<1x1x128xf32>
      tpu.vector_store %arg8[%c0_22, %c0_23, %c0_24], %40 {strides = array<i32>} : memref<1x1x128xf32, #tpu.memory_space<vmem>>, vector<1x1x128xf32>,
    } else {
    }
    return
  }
  func.func @transform_0(%arg0: i32, %arg1: i32, %arg2: i32) -> (i32, i32) {
    %c0_i32 = arith.constant 0 : i32
    return %arg0, %arg2 : i32, i32
  }
  func.func @transform_1(%arg0: i32, %arg1: i32, %arg2: i32) -> (i32, i32) {
    %c0_i32 = arith.constant 0 : i32
    return %arg2, %arg1 : i32, i32
  }
  func.func @transform_2(%arg0: i32, %arg1: i32, %arg2: i32) -> (i32, i32) {
    %c0_i32 = arith.constant 0 : i32
    %c0_i32_0 = arith.constant 0 : i32
    return %c0_i32, %arg1 : i32, i32
  }
  func.func @transform_3(%arg0: i32, %arg1: i32, %arg2: i32) -> (i32, i32) {
    %c0_i32 = arith.constant 0 : i32
    return %arg0, %arg1 : i32, i32
  }
  func.func @transform_4(%arg0: i32, %arg1: i32, %arg2: i32) -> (i32, i32, i32) {
    %c0_i32 = arith.constant 0 : i32
    %c0_i32_0 = arith.constant 0 : i32
    return %arg0, %c0_i32, %arg1 : i32, i32, i32
  }
  func.func @transform_5(%arg0: i32, %arg1: i32, %arg2: i32) -> (i32, i32, i32) {
    %c0_i32 = arith.constant 0 : i32
    %c0_i32_0 = arith.constant 0 : i32
    return %arg0, %c0_i32, %arg1 : i32, i32, i32
  }
}

module attributes {stable_mosaic.version = 11 : i64} {
  func.func @_bn_affine_chw_kernel(%arg0: i32, %arg1: i32, %arg2: memref<64x128xbf16, #tpu.memory_space<vmem>>, %arg3: memref<1x128xf32, #tpu.memory_space<vmem>>, %arg4: memref<1x128xf32, #tpu.memory_space<vmem>>, %arg5: memref<1x128x64xf32, #tpu.memory_space<vmem>>) attributes {dimension_semantics = [#tpu.dimension_semantics<parallel>, #tpu.dimension_semantics<parallel>], iteration_bounds = array<i64: 2, 1>, scalar_prefetch = 0 : i64, scratch_operands = 0 : i64, tpu.core_type = #tpu.core_type<tc>, window_params = [{transform_indices = @transform_0, window_bounds = array<i64: 64, 128>}, {transform_indices = @transform_1, window_bounds = array<i64: 1, 128>}, {transform_indices = @transform_2, window_bounds = array<i64: 1, 128>}, {transform_indices = @transform_3, window_bounds = array<i64: 1, 128, 64>}]} {
    %c0 = arith.constant 0 : index
    %c0_0 = arith.constant 0 : index
    %0 = vector.load %arg2[%c0, %c0_0] : memref<64x128xbf16, #tpu.memory_space<vmem>>, vector<64x128xbf16>
    %1 = arith.extf %0 : vector<64x128xbf16> to vector<64x128xf32>
    %c0_1 = arith.constant 0 : index
    %c0_2 = arith.constant 0 : index
    %2 = vector.load %arg3[%c0_1, %c0_2] : memref<1x128xf32, #tpu.memory_space<vmem>>, vector<1x128xf32>
    %3 = vector.broadcast %2 : vector<1x128xf32> to vector<64x128xf32>
    %4 = arith.mulf %1, %3 : vector<64x128xf32>
    %c0_3 = arith.constant 0 : index
    %c0_4 = arith.constant 0 : index
    %5 = vector.load %arg4[%c0_3, %c0_4] : memref<1x128xf32, #tpu.memory_space<vmem>>, vector<1x128xf32>
    %6 = vector.broadcast %5 : vector<1x128xf32> to vector<64x128xf32>
    %7 = arith.addf %4, %6 : vector<64x128xf32>
    %8 = tpu.transpose %7, [1, 0] : vector<64x128xf32> -> vector<128x64xf32>
    %c0_5 = arith.constant 0 : index
    %c0_6 = arith.constant 0 : index
    %c0_7 = arith.constant 0 : index
    %9 = vector.load %arg5[%c0_5, %c0_6, %c0_7] : memref<1x128x64xf32, #tpu.memory_space<vmem>>, vector<1x128x64xf32>
    %10 = vector.shape_cast %9 : vector<1x128x64xf32> to vector<128x64xf32>
    %11 = vector.shape_cast %8 : vector<128x64xf32> to vector<1x128x64xf32>
    tpu.vector_store %arg5[%c0_5, %c0_6, %c0_7], %11 {strides = array<i32>} : memref<1x128x64xf32, #tpu.memory_space<vmem>>, vector<1x128x64xf32>,
    return
  }
  func.func @transform_0(%arg0: i32, %arg1: i32) -> (i32, i32) {
    %c0_i32 = arith.constant 0 : i32
    return %arg0, %arg1 : i32, i32
  }
  func.func @transform_1(%arg0: i32, %arg1: i32) -> (i32, i32) {
    %c0_i32 = arith.constant 0 : i32
    %c0_i32_0 = arith.constant 0 : i32
    return %c0_i32, %arg1 : i32, i32
  }
  func.func @transform_2(%arg0: i32, %arg1: i32) -> (i32, i32) {
    %c0_i32 = arith.constant 0 : i32
    %c0_i32_0 = arith.constant 0 : i32
    return %c0_i32, %arg1 : i32, i32
  }
  func.func @transform_3(%arg0: i32, %arg1: i32) -> (i32, i32, i32) {
    %c0_i32 = arith.constant 0 : i32
    %c0_i32_0 = arith.constant 0 : i32
    return %arg0, %arg1, %c0_i32 : i32, i32, i32
  }
}

</mosaic_0001>

<llo_original>
// kernel: conv_bn2_forward.3
$region0: #{conv_bn2_forward.3}
  #allocation0 [shape = 'u32[]', space=smem, size = 0x4, offset = 0x4, fixed_abs, tag = 'smem constant byte address 0x4 - core index']
  #allocation1 [shape = 'u32[144,128]{1,0:T(1,128)}', space=vmem, size = 0x12000, scoped, tag = 'internal scratch']
  %s0 = inlined_call_operand.vmem [shape: bf16[128,128], index: 0, kind: input, shape index: {}]
  %s1 = inlined_call_operand.vmem [shape: f32[1,128], index: 1, kind: input, shape index: {}]
  %s2 = inlined_call_operand.vmem [shape: f32[1,128], index: 2, kind: input, shape index: {}]
  %s3 = inlined_call_operand.vmem [shape: f32[2,128,64], index: 3, kind: output, shape index: {}]
  %s4 = sld [smem:[#allocation0]]
  $region45: #{conv_bn2_forward.3} parent=0
    _
  %s6 = ssub.s32 1, %s4
  %s7 = scalar_select 0, %s6, %s4
  loop: start=0, step=1, limit=4
  $region2: #{conv_bn2_forward.3} parent=0 // loop_pre_header
    _
  $region3: #{conv_bn2_forward.3} parent=0 // loop_header
    %s9 = sphi 0, %s13
    %p10 = scmp.ge.s32.totalorder %s9, 4
    %s16 = sphi 0, %s28
    %s17 = sphi 0, %s24
    %s18 = sphi 0, %s16
    %s19 = sphi 0, %s17
    %s20 = sphi 0, %s18
    %s21 = sphi 0, %s19
    %s33 = sphi 0, %s35
    %s36 = sphi 0, %s33
    %s37 = sphi 0, %s36
    %s53 = sphi 0, %s37
    %s59 = sphi 0, %s61
    %s62 = sphi 0, %s59
    %s63 = sphi 0, %s62
    %s79 = sphi 0, %s63
    %s85 = sphi 0, %s87
    %s88 = sphi 0, %s85
    %s89 = sphi 0, %s88
    %s105 = sphi 0, %s89
    %s113 = sphi 0, %s115
    %s116 = sphi 0, %s113
    %s117 = sphi 0, %s116
    %s133 = sphi 0, %s117
  $region4: #{conv_bn2_forward.3} parent=0 // loop_header_branch
    %12 = sbr.rel (%p10) target = $region8
  $region5: #{conv_bn2_forward.3} parent=0 // loop_body
    %s14 = ssub.s32 %s9, 1
    %s15 = ssub.s32 %s9, 2
    %s22 = sadd.s32 1, %s17
    %p23 = scmp.ge.s32.totalorder %s22, 1
    %s24 = scalar_select %p23, 0, %s22
    %s25 = sadd.s32 1, %s16
    %s26 = scalar_select %p23, %s25, %s16
    %p27 = scmp.ge.s32.totalorder %s26, 2
    %s28 = scalar_select %p27, 0, %s26
    %s29 = ssub.s32 %s16, %s28
    %s30 = ssub.s32 %s17, %s24
    %s31 = sor.u32 %s29, %s30
    %p32 = scmp.eq.s32.totalorder %s31, 0
    %s34 = sadd.s32 %s33, 1
    %s35 = scalar_select %p32, %s33, %s34
    %p38 = pneg %p32
    %p39 = scmp.eq.s32.totalorder %s9, 1
    %p40 = por %p38, %p39
    %p41 = scmp.ne.s32.totalorder %s33, %s36
    %p42 = scmp.eq.s32.totalorder %s9, 0
    %p43 = por %p41, %p42
    %p44 = scmp.ne.s32.totalorder %s33, %s36
    %p45 = scmp.eq.s32.totalorder %s14, 1
    %p46 = por %p44, %p45
    %p47 = scmp.ne.s32.totalorder %s36, %s37
    %p48 = scmp.eq.s32.totalorder %s14, 0
    %p49 = por %p47, %p48
    %p50 = scmp.ne.s32.totalorder %s36, %s37
    %p51 = scmp.eq.s32.totalorder %s15, 1
    %p52 = por %p50, %p51
    %p54 = scmp.ne.s32.totalorder %s37, %s53
    %p55 = scmp.eq.s32.totalorder %s15, 0
    %p56 = por %p54, %p55
    %s57 = ssub.s32 %s17, %s24
    %p58 = scmp.eq.s32.totalorder %s57, 0
    %s60 = sadd.s32 %s59, 1
    %s61 = scalar_select %p58, %s59, %s60
    %p64 = pneg %p58
    %p65 = scmp.eq.s32.totalorder %s9, 1
    %p66 = por %p64, %p65
    %p67 = scmp.ne.s32.totalorder %s59, %s62
    %p68 = scmp.eq.s32.totalorder %s9, 0
    %p69 = por %p67, %p68
    %p70 = scmp.ne.s32.totalorder %s59, %s62
    %p71 = scmp.eq.s32.totalorder %s14, 1
    %p72 = por %p70, %p71
    %p73 = scmp.ne.s32.totalorder %s62, %s63
    %p74 = scmp.eq.s32.totalorder %s14, 0
    %p75 = por %p73, %p74
    %p76 = scmp.ne.s32.totalorder %s62, %s63
    %p77 = scmp.eq.s32.totalorder %s15, 1
    %p78 = por %p76, %p77
    %p80 = scmp.ne.s32.totalorder %s63, %s79
    %p81 = scmp.eq.s32.totalorder %s15, 0
    %p82 = por %p80, %p81
    %s83 = ssub.s32 %s17, %s24
    %p84 = scmp.eq.s32.totalorder %s83, 0
    %s86 = sadd.s32 %s85, 1
    %s87 = scalar_select %p84, %s85, %s86
    %p90 = pneg %p84
    %p91 = scmp.eq.s32.totalorder %s9, 1
    %p92 = por %p90, %p91
    %p93 = scmp.ne.s32.totalorder %s85, %s88
    %p94 = scmp.eq.s32.totalorder %s9, 0
    %p95 = por %p93, %p94
    %p96 = scmp.ne.s32.totalorder %s85, %s88
    %p97 = scmp.eq.s32.totalorder %s14, 1
    %p98 = por %p96, %p97
    %p99 = scmp.ne.s32.totalorder %s88, %s89
    %p100 = scmp.eq.s32.totalorder %s14, 0
    %p101 = por %p99, %p100
    %p102 = scmp.ne.s32.totalorder %s88, %s89
    %p103 = scmp.eq.s32.totalorder %s15, 1
    %p104 = por %p102, %p103
    %p106 = scmp.ne.s32.totalorder %s89, %s105
    %p107 = scmp.eq.s32.totalorder %s15, 0
    %p108 = por %p106, %p107
    %s109 = ssub.s32 %s16, %s28
    %s110 = ssub.s32 %s17, %s24
    %s111 = sor.u32 %s109, %s110
    %p112 = scmp.eq.s32.totalorder %s111, 0
    %s114 = sadd.s32 %s113, 1
    %s115 = scalar_select %p112, %s113, %s114
    %p118 = pneg %p112
    %p119 = scmp.eq.s32.totalorder %s9, 1
    %p120 = por %p118, %p119
    %p121 = scmp.ne.s32.totalorder %s113, %s116
    %p122 = scmp.eq.s32.totalorder %s9, 0
    %p123 = por %p121, %p122
    %p124 = scmp.ne.s32.totalorder %s113, %s116
    %p125 = scmp.eq.s32.totalorder %s14, 1
    %p126 = por %p124, %p125
    %p127 = scmp.ne.s32.totalorder %s116, %s117
    %p128 = scmp.eq.s32.totalorder %s14, 0
    %p129 = por %p127, %p128
    %p130 = scmp.ne.s32.totalorder %s116, %s117
    %p131 = scmp.eq.s32.totalorder %s15, 1
    %p132 = por %p130, %p131
    %p134 = scmp.ne.s32.totalorder %s117, %s133
    %p135 = scmp.eq.s32.totalorder %s15, 0
    %p136 = por %p134, %p135
    %p137 = scmp.le.s32.totalorder 1, %s9
    %p138 = scmp.lt.s32.totalorder %s9, 3
    %p139 = pnand %p137, %p138
    %p140 = pneg %p139
    // Predicated region
    $region9: #{conv_bn2_forward.3} parent=5 // pred_check
      _
    $region10: #{conv_bn2_forward.3} parent=5 // pred_check_branch
      %142 = sbr.rel (%p139) target = $region12
    $region11: #{conv_bn2_forward.3} parent=5 // pred_region
      %s143 = ssub.s32 %s9, 1
      // Predicated region
      $region13: #{conv_bn2_forward.3} parent=11 // pred_check
        %p144 = pneg %p75
      $region14: #{conv_bn2_forward.3} parent=11 // pred_check_branch
        %146 = sbr.rel (%p144) target = $region16
      $region15: #{conv_bn2_forward.3} parent=11 // pred_region
        %p147 = scmp.lt.s32.totalorder %s19, 0
        %s148 = scalar_select %p147, %s19, 0
        %s149 = scalar_lea.vmem %s1, %s148
      $region16: #{conv_bn2_forward.3} parent=11 // pred_fallthru
        _
      // Predicated region
      $region17: #{conv_bn2_forward.3} parent=11 // pred_check
        %p150 = pneg %p101
      $region18: #{conv_bn2_forward.3} parent=11 // pred_check_branch
        %152 = sbr.rel (%p150) target = $region20
      $region19: #{conv_bn2_forward.3} parent=11 // pred_region
        %p153 = scmp.lt.s32.totalorder %s19, 0
        %s154 = scalar_select %p153, %s19, 0
        %s155 = scalar_lea.vmem %s2, %s154
      $region20: #{conv_bn2_forward.3} parent=11 // pred_fallthru
        _
    $region12: #{conv_bn2_forward.3} parent=5 // pred_fallthru
      _
    %p156 = scmp.lt.s32.totalorder %s9, 2
    // Predicated region
    $region21: #{conv_bn2_forward.3} parent=5 // pred_check
      %p157 = pneg %p156
    $region22: #{conv_bn2_forward.3} parent=5 // pred_check_branch
      %159 = sbr.rel (%p157) target = $region24
    $region23: #{conv_bn2_forward.3} parent=5 // pred_region
      // Predicated region
      $region25: #{conv_bn2_forward.3} parent=23 // pred_check
        %p160 = pneg %p43
      $region26: #{conv_bn2_forward.3} parent=23 // pred_check_branch
        %162 = sbr.rel (%p160) target = $region28
      $region27: #{conv_bn2_forward.3} parent=23 // pred_region
        %s163 = smul.u32 8, %s16
        %p164 = scmp.lt.s32.totalorder %s163, 15
        %s165 = scalar_select %p164, %s163, 15
        %p166 = scmp.lt.s32.totalorder %s17, 0
        %s167 = scalar_select %p166, %s17, 0
        %s168 = sadd.s32 %s167, %s165
        %s169 = smul.addr %s168, 4
        %s170 = scalar_lea.vmem %s0, %s169
        %s171 = smul.u32 8, %s16
      $region28: #{conv_bn2_forward.3} parent=23 // pred_fallthru
        _
    $region24: #{conv_bn2_forward.3} parent=5 // pred_fallthru
      _
    %p172 = scmp.le.s32.totalorder 1, %s9
    %p173 = scmp.lt.s32.totalorder %s9, 3
    %p174 = pnand %p172, %p173
    %p175 = pneg %p174
    // Predicated region
    $region29: #{conv_bn2_forward.3} parent=5 // pred_check
      _
    $region30: #{conv_bn2_forward.3} parent=5 // pred_check_branch
      %177 = sbr.rel (%p174) target = $region32
    $region31: #{conv_bn2_forward.3} parent=5 // pred_region
      %s178 = ssub.s32 %s9, 1
      %s179 = smul.u32 8, %s18
      %p180 = scmp.lt.s32.totalorder %s179, 15
      %s181 = scalar_select %p180, %s179, 15
      %p182 = scmp.lt.s32.totalorder %s19, 0
      %s183 = scalar_select %p182, %s19, 0
      %s184 = sadd.s32 %s183, %s181
      %s185 = smul.addr %s184, 4
      %s186 = scalar_lea.vmem %s0, %s185
      %p187 = pneg %p49
      %p188 = pneg %p46
      %p189 = scmp.lt.s32.totalorder %s19, 0
      %s190 = scalar_select %p189, %s19, 0
      %s191 = scalar_lea.vmem %s1, %s190
      %p192 = pneg %p75
      %p193 = pneg %p72
      %p194 = scmp.lt.s32.totalorder %s19, 0
      %s195 = scalar_select %p194, %s19, 0
      %s196 = scalar_lea.vmem %s2, %s195
      %p197 = pneg %p101
      %p198 = pneg %p98
      %p199 = pneg %p129
      %p200 = pneg %p126
      %s201 = smul.u32 16, %s19
      %p202 = scmp.lt.s32.totalorder %s18, 1
      %s203 = scalar_select %p202, %s18, 1
      %p204 = scmp.lt.s32.totalorder %s201, 15
      %s205 = scalar_select %p204, %s201, 15
      %s206 = smul.addr %s203, 16
      %s207 = sadd.s32 %s205, %s206
      %s208 = smul.addr %s207, 8
      %s209 = scalar_lea.vmem %s3, %s208
      %s210 = smul.u32 8, %s18
      %p211 = scmp.lt.s32.totalorder %s210, 15
      %s212 = scalar_select %p211, %s210, 15
      %p213 = scmp.lt.s32.totalorder %s19, 0
      %s214 = scalar_select %p213, %s19, 0
      %s215 = sadd.s32 %s214, %s212
      %s216 = smul.addr %s215, 4
      %s217 = scalar_lea.vmem %s0, %s216
      %s218 = smul.u32 8, %s18
      %p219 = scmp.lt.s32.totalorder %s19, 0
      %s220 = scalar_select %p219, %s19, 0
      %s221 = scalar_lea.vmem %s1, %s220
      %p222 = scmp.lt.s32.totalorder %s19, 0
      %s223 = scalar_select %p222, %s19, 0
      %s224 = scalar_lea.vmem %s2, %s223
      %s225 = smul.u32 16, %s19
      %p226 = scmp.lt.s32.totalorder %s18, 1
      %s227 = scalar_select %p226, %s18, 1
      %p228 = scmp.lt.s32.totalorder %s225, 15
      %s229 = scalar_select %p228, %s225, 15
      %s230 = smul.addr %s227, 16
      %s231 = sadd.s32 %s229, %s230
      %s232 = smul.addr %s231, 8
      %s233 = scalar_lea.vmem %s3, %s232
      %s234 = smul.u32 16, %s19
      %v235 = vld [vmem:[%s217] sm:$0xf]
      %v236 = vld [vmem:[%s217 + $0x4] sm:$0xf]
      %v237 = vld [vmem:[%s217 + $0x8] sm:$0xf]
      %v238 = vld [vmem:[%s217 + $0xc] sm:$0xf]
      %v239 = vld [vmem:[%s217 + $0x10] sm:$0xf]
      %v240 = vld [vmem:[%s217 + $0x14] sm:$0xf]
      %v241 = vld [vmem:[%s217 + $0x18] sm:$0xf]
      %v242 = vld [vmem:[%s217 + $0x1c] sm:$0xf]
      %v243 = vunpack.c.l.bf16 %v235
      %v244 = vunpack.c.l.bf16 %v236
      %v245 = vunpack.c.l.bf16 %v237
      %v246 = vunpack.c.l.bf16 %v238
      %v247 = vunpack.c.l.bf16 %v239
      %v248 = vunpack.c.l.bf16 %v240
      %v249 = vunpack.c.l.bf16 %v241
      %v250 = vunpack.c.l.bf16 %v242
      %v251 = vld [vmem:[%s221] sm:$0x1]
      %v253 = vlaneseq
      %v254 = vshrl.u32 %v253, 7
      %v255 = vsub.s32 0, %v254
      %v256 = vrot.slane %v251, %v255
      %v258 = vmul.f32 %v243, %v256
      %v259 = vmul.f32 %v244, %v256
      %v260 = vmul.f32 %v245, %v256
      %v261 = vmul.f32 %v246, %v256
      %v262 = vmul.f32 %v247, %v256
      %v263 = vmul.f32 %v248, %v256
      %v264 = vmul.f32 %v249, %v256
      %v265 = vmul.f32 %v250, %v256
      %v266 = vld [vmem:[%s224] sm:$0x1]
      %v268 = vlaneseq
      %v269 = vshrl.u32 %v268, 7
      %v270 = vsub.s32 0, %v269
      %v271 = vrot.slane %v266, %v270
      %v273 = vadd.f32 %v258, %v271
      %v274 = vadd.f32 %v259, %v271
      %v275 = vadd.f32 %v260, %v271
      %v276 = vadd.f32 %v261, %v271
      %v277 = vadd.f32 %v262, %v271
      %v278 = vadd.f32 %v263, %v271
      %v279 = vadd.f32 %v264, %v271
      %v280 = vadd.f32 %v265, %v271
      %281 = vxpose.xlu0.b32.start [1/16] %v273, 128
      %282 = vxpose.xlu0.b32.cont [2/16] %v274, 128
      %283 = vxpose.xlu0.b32.cont [3/16] %v275, 128
      %284 = vxpose.xlu0.b32.cont [4/16] %v276, 128
      %285 = vxpose.xlu0.b32.cont [5/16] %v277, 128
      %286 = vxpose.xlu0.b32.cont [6/16] %v278, 128
      %287 = vxpose.xlu0.b32.cont [7/16] %v279, 128
      %288 = vxpose.xlu0.b32.cont [8/16] %v280, 128
      %289 = vxpose.xlu0.b32.cont [9/16] 0.0, 128
      %290 = vxpose.xlu0.b32.cont [10/16] 0.0, 128
      %291 = vxpose.xlu0.b32.cont [11/16] 0.0, 128
      %292 = vxpose.xlu0.b32.cont [12/16] 0.0, 128
      %293 = vxpose.xlu0.b32.cont [13/16] 0.0, 128
      %294 = vxpose.xlu0.b32.cont [14/16] 0.0, 128
      %295 = vxpose.xlu0.b32.cont [15/16] 0.0, 128
      %296 = vxpose.xlu0.b32.end [16/16] 0.0, 128
      %v297 = vpop.trf.xlu0
      %v298 = vpop.trf.xlu0
      %v299 = vpop.trf.xlu0
      %v300 = vpop.trf.xlu0
      %v301 = vpop.trf.xlu0
      %v302 = vpop.trf.xlu0
      %v303 = vpop.trf.xlu0
      %v304 = vpop.trf.xlu0
      %v305 = vpop.trf.xlu0
      %v306 = vpop.trf.xlu0
      %v307 = vpop.trf.xlu0
      %v308 = vpop.trf.xlu0
      %v309 = vpop.trf.xlu0
      %v310 = vpop.trf.xlu0
      %v311 = vpop.trf.xlu0
      %v312 = vpop.trf.xlu0
      %vm313 = vcmask 523264
      %314 = vst.msk [vmem:[%s233] sm:$0xff] %vm313, %v297
      %315 = vst.msk [vmem:[%s233 + $0x8] sm:$0xff] %vm313, %v298
      %316 = vst.msk [vmem:[%s233 + $0x10] sm:$0xff] %vm313, %v299
      %317 = vst.msk [vmem:[%s233 + $0x18] sm:$0xff] %vm313, %v300
      %318 = vst.msk [vmem:[%s233 + $0x20] sm:$0xff] %vm313, %v301
      %319 = vst.msk [vmem:[%s233 + $0x28] sm:$0xff] %vm313, %v302
      %320 = vst.msk [vmem:[%s233 + $0x30] sm:$0xff] %vm313, %v303
      %321 = vst.msk [vmem:[%s233 + $0x38] sm:$0xff] %vm313, %v304
      %322 = vst.msk [vmem:[%s233 + $0x40] sm:$0xff] %vm313, %v305
      %323 = vst.msk [vmem:[%s233 + $0x48] sm:$0xff] %vm313, %v306
      %324 = vst.msk [vmem:[%s233 + $0x50] sm:$0xff] %vm313, %v307
      %325 = vst.msk [vmem:[%s233 + $0x58] sm:$0xff] %vm313, %v308
      %326 = vst.msk [vmem:[%s233 + $0x60] sm:$0xff] %vm313, %v309
      %327 = vst.msk [vmem:[%s233 + $0x68] sm:$0xff] %vm313, %v310
      %328 = vst.msk [vmem:[%s233 + $0x70] sm:$0xff] %vm313, %v311
      %329 = vst.msk [vmem:[%s233 + $0x78] sm:$0xff] %vm313, %v312
      %s330 = smul.u32 16, %s19
      %p331 = scmp.lt.s32.totalorder %s18, 1
      %s332 = scalar_select %p331, %s18, 1
      %p333 = scmp.lt.s32.totalorder %s330, 15
      %s334 = scalar_select %p333, %s330, 15
      %s335 = smul.addr %s332, 16
      %s336 = sadd.s32 %s334, %s335
      %s337 = smul.addr %s336, 8
      %s338 = scalar_lea.vmem %s3, %s337
      // Predicated region
      $region33: #{conv_bn2_forward.3} parent=31 // pred_check
        %p339 = pneg %p126
      $region34: #{conv_bn2_forward.3} parent=31 // pred_check_branch
        %341 = sbr.rel (%p339) target = $region36
      $region35: #{conv_bn2_forward.3} parent=31 // pred_region
        %s342 = smul.u32 16, %s19
      $region36: #{conv_bn2_forward.3} parent=31 // pred_fallthru
        _
    $region32: #{conv_bn2_forward.3} parent=5 // pred_fallthru
      _
    %p343 = scmp.le.s32.totalorder 2, %s9
    // Predicated region
    $region37: #{conv_bn2_forward.3} parent=5 // pred_check
      %p344 = pneg %p343
    $region38: #{conv_bn2_forward.3} parent=5 // pred_check_branch
      %346 = sbr.rel (%p344) target = $region40
    $region39: #{conv_bn2_forward.3} parent=5 // pred_region
      %s347 = ssub.s32 %s9, 2
      // Predicated region
      $region41: #{conv_bn2_forward.3} parent=39 // pred_check
        %p348 = pneg %p132
      $region42: #{conv_bn2_forward.3} parent=39 // pred_check_branch
        %350 = sbr.rel (%p348) target = $region44
      $region43: #{conv_bn2_forward.3} parent=39 // pred_region
        %s351 = smul.u32 16, %s21
        %p352 = scmp.lt.s32.totalorder %s20, 1
        %s353 = scalar_select %p352, %s20, 1
        %p354 = scmp.lt.s32.totalorder %s351, 15
        %s355 = scalar_select %p354, %s351, 15
        %s356 = smul.addr %s353, 16
        %s357 = sadd.s32 %s355, %s356
        %s358 = smul.addr %s357, 8
        %s359 = scalar_lea.vmem %s3, %s358
      $region44: #{conv_bn2_forward.3} parent=39 // pred_fallthru
        _
    $region40: #{conv_bn2_forward.3} parent=5 // pred_fallthru
      _
  $region6: #{conv_bn2_forward.3} parent=0 // loop_footer
    %s13 = sadd.s32 1, %s9
  $region7: #{conv_bn2_forward.3} parent=0 // loop_footer_branch
    %8 = sbr.rel target = $region3
  $region8: #{conv_bn2_forward.3} parent=0 // loop_exit
    _

// kernel: conv_bn2_forward.2
$region0: #{conv_bn2_forward.2}
  #allocation0 [shape = 'u32[]', space=smem, size = 0x4, offset = 0x4, fixed_abs, tag = 'smem constant byte address 0x4 - core index']
  #allocation1 [shape = 'u32[144,128]{1,0:T(1,128)}', space=vmem, size = 0x12000, scoped, tag = 'internal scratch']
  #allocation2 [shape = 'f32[64,128]{1,0:T(8,128)}', space=vmem, size = 0x8000, scoped, tag = 'scratch operand']
  %s0 = inlined_call_operand.vmem [shape: bf16[128,128], index: 0, kind: input, shape index: {}]
  %s1 = inlined_call_operand.vmem [shape: bf16[128,128], index: 1, kind: input, shape index: {}]
  %s2 = inlined_call_operand.vmem [shape: f32[1,128], index: 2, kind: input, shape index: {}]
  %s3 = inlined_call_operand.vmem [shape: bf16[128,128], index: 3, kind: output, shape index: {0}]
  %s4 = inlined_call_operand.vmem [shape: f32[2,1,128], index: 4, kind: output, shape index: {1}]
  %s5 = inlined_call_operand.vmem [shape: f32[2,1,128], index: 5, kind: output, shape index: {2}]
  %6 = xla_tuple %s3, %s4, %s5
  %s7 = sld [smem:[#allocation0]]
  $region69: #{conv_bn2_forward.2} parent=0
    _
  %s9 = ssub.s32 1, %s7
  %s10 = scalar_select 0, %s9, %s7
  loop: start=0, step=1, limit=4
  $region2: #{conv_bn2_forward.2} parent=0 // loop_pre_header
    _
  $region3: #{conv_bn2_forward.2} parent=0 // loop_header
    %s12 = sphi 0, %s16
    %p13 = scmp.ge.s32.totalorder %s12, 4
    %s19 = sphi 0, %s38
    %s20 = sphi 0, %s34
    %s21 = sphi 0, %s30
    %s22 = sphi 0, %s19
    %s23 = sphi 0, %s20
    %s24 = sphi 0, %s21
    %s25 = sphi 0, %s22
    %s26 = sphi 0, %s23
    %s27 = sphi 0, %s24
    %s43 = sphi 0, %s45
    %s46 = sphi 0, %s43
    %s47 = sphi 0, %s46
    %s63 = sphi 0, %s47
    %s71 = sphi 0, %s73
    %s74 = sphi 0, %s71
    %s75 = sphi 0, %s74
    %s91 = sphi 0, %s75
    %s97 = sphi 0, %s99
    %s100 = sphi 0, %s97
    %s101 = sphi 0, %s100
    %s117 = sphi 0, %s101
    %s125 = sphi 0, %s127
    %s128 = sphi 0, %s125
    %s129 = sphi 0, %s128
    %s145 = sphi 0, %s129
    %s153 = sphi 0, %s155
    %s156 = sphi 0, %s153
    %s157 = sphi 0, %s156
    %s173 = sphi 0, %s157
    %s181 = sphi 0, %s183
    %s184 = sphi 0, %s181
    %s185 = sphi 0, %s184
    %s201 = sphi 0, %s185
  $region4: #{conv_bn2_forward.2} parent=0 // loop_header_branch
    %15 = sbr.rel (%p13) target = $region8
  $region5: #{conv_bn2_forward.2} parent=0 // loop_body
    %s17 = ssub.s32 %s12, 1
    %s18 = ssub.s32 %s12, 2
    %s28 = sadd.s32 1, %s21
    %p29 = scmp.ge.s32.totalorder %s28, 1
    %s30 = scalar_select %p29, 0, %s28
    %s31 = sadd.s32 1, %s20
    %s32 = scalar_select %p29, %s31, %s20
    %p33 = scmp.ge.s32.totalorder %s32, 1
    %s34 = scalar_select %p33, 0, %s32
    %s35 = sadd.s32 1, %s19
    %s36 = scalar_select %p33, %s35, %s19
    %p37 = scmp.ge.s32.totalorder %s36, 2
    %s38 = scalar_select %p37, 0, %s36
    %s39 = ssub.s32 %s19, %s38
    %s40 = ssub.s32 %s21, %s30
    %s41 = sor.u32 %s39, %s40
    %p42 = scmp.eq.s32.totalorder %s41, 0
    %s44 = sadd.s32 %s43, 1
    %s45 = scalar_select %p42, %s43, %s44
    %p48 = pneg %p42
    %p49 = scmp.eq.s32.totalorder %s12, 1
    %p50 = por %p48, %p49
    %p51 = scmp.ne.s32.totalorder %s43, %s46
    %p52 = scmp.eq.s32.totalorder %s12, 0
    %p53 = por %p51, %p52
    %p54 = scmp.ne.s32.totalorder %s43, %s46
    %p55 = scmp.eq.s32.totalorder %s17, 1
    %p56 = por %p54, %p55
    %p57 = scmp.ne.s32.totalorder %s46, %s47
    %p58 = scmp.eq.s32.totalorder %s17, 0
    %p59 = por %p57, %p58
    %p60 = scmp.ne.s32.totalorder %s46, %s47
    %p61 = scmp.eq.s32.totalorder %s18, 1
    %p62 = por %p60, %p61
    %p64 = scmp.ne.s32.totalorder %s47, %s63
    %p65 = scmp.eq.s32.totalorder %s18, 0
    %p66 = por %p64, %p65
    %s67 = ssub.s32 %s21, %s30
    %s68 = ssub.s32 %s20, %s34
    %s69 = sor.u32 %s67, %s68
    %p70 = scmp.eq.s32.totalorder %s69, 0
    %s72 = sadd.s32 %s71, 1
    %s73 = scalar_select %p70, %s71, %s72
    %p76 = pneg %p70
    %p77 = scmp.eq.s32.totalorder %s12, 1
    %p78 = por %p76, %p77
    %p79 = scmp.ne.s32.totalorder %s71, %s74
    %p80 = scmp.eq.s32.totalorder %s12, 0
    %p81 = por %p79, %p80
    %p82 = scmp.ne.s32.totalorder %s71, %s74
    %p83 = scmp.eq.s32.totalorder %s17, 1
    %p84 = por %p82, %p83
    %p85 = scmp.ne.s32.totalorder %s74, %s75
    %p86 = scmp.eq.s32.totalorder %s17, 0
    %p87 = por %p85, %p86
    %p88 = scmp.ne.s32.totalorder %s74, %s75
    %p89 = scmp.eq.s32.totalorder %s18, 1
    %p90 = por %p88, %p89
    %p92 = scmp.ne.s32.totalorder %s75, %s91
    %p93 = scmp.eq.s32.totalorder %s18, 0
    %p94 = por %p92, %p93
    %s95 = ssub.s32 %s20, %s34
    %p96 = scmp.eq.s32.totalorder %s95, 0
    %s98 = sadd.s32 %s97, 1
    %s99 = scalar_select %p96, %s97, %s98
    %p102 = pneg %p96
    %p103 = scmp.eq.s32.totalorder %s12, 1
    %p104 = por %p102, %p103
    %p105 = scmp.ne.s32.totalorder %s97, %s100
    %p106 = scmp.eq.s32.totalorder %s12, 0
    %p107 = por %p105, %p106
    %p108 = scmp.ne.s32.totalorder %s97, %s100
    %p109 = scmp.eq.s32.totalorder %s17, 1
    %p110 = por %p108, %p109
    %p111 = scmp.ne.s32.totalorder %s100, %s101
    %p112 = scmp.eq.s32.totalorder %s17, 0
    %p113 = por %p111, %p112
    %p114 = scmp.ne.s32.totalorder %s100, %s101
    %p115 = scmp.eq.s32.totalorder %s18, 1
    %p116 = por %p114, %p115
    %p118 = scmp.ne.s32.totalorder %s101, %s117
    %p119 = scmp.eq.s32.totalorder %s18, 0
    %p120 = por %p118, %p119
    %s121 = ssub.s32 %s19, %s38
    %s122 = ssub.s32 %s20, %s34
    %s123 = sor.u32 %s121, %s122
    %p124 = scmp.eq.s32.totalorder %s123, 0
    %s126 = sadd.s32 %s125, 1
    %s127 = scalar_select %p124, %s125, %s126
    %p130 = pneg %p124
    %p131 = scmp.eq.s32.totalorder %s12, 1
    %p132 = por %p130, %p131
    %p133 = scmp.ne.s32.totalorder %s125, %s128
    %p134 = scmp.eq.s32.totalorder %s12, 0
    %p135 = por %p133, %p134
    %p136 = scmp.ne.s32.totalorder %s125, %s128
    %p137 = scmp.eq.s32.totalorder %s17, 1
    %p138 = por %p136, %p137
    %p139 = scmp.ne.s32.totalorder %s128, %s129
    %p140 = scmp.eq.s32.totalorder %s17, 0
    %p141 = por %p139, %p140
    %p142 = scmp.ne.s32.totalorder %s128, %s129
    %p143 = scmp.eq.s32.totalorder %s18, 1
    %p144 = por %p142, %p143
    %p146 = scmp.ne.s32.totalorder %s129, %s145
    %p147 = scmp.eq.s32.totalorder %s18, 0
    %p148 = por %p146, %p147
    %s149 = ssub.s32 %s19, %s38
    %s150 = ssub.s32 %s20, %s34
    %s151 = sor.u32 %s149, %s150
    %p152 = scmp.eq.s32.totalorder %s151, 0
    %s154 = sadd.s32 %s153, 1
    %s155 = scalar_select %p152, %s153, %s154
    %p158 = pneg %p152
    %p159 = scmp.eq.s32.totalorder %s12, 1
    %p160 = por %p158, %p159
    %p161 = scmp.ne.s32.totalorder %s153, %s156
    %p162 = scmp.eq.s32.totalorder %s12, 0
    %p163 = por %p161, %p162
    %p164 = scmp.ne.s32.totalorder %s153, %s156
    %p165 = scmp.eq.s32.totalorder %s17, 1
    %p166 = por %p164, %p165
    %p167 = scmp.ne.s32.totalorder %s156, %s157
    %p168 = scmp.eq.s32.totalorder %s17, 0
    %p169 = por %p167, %p168
    %p170 = scmp.ne.s32.totalorder %s156, %s157
    %p171 = scmp.eq.s32.totalorder %s18, 1
    %p172 = por %p170, %p171
    %p174 = scmp.ne.s32.totalorder %s157, %s173
    %p175 = scmp.eq.s32.totalorder %s18, 0
    %p176 = por %p174, %p175
    %s177 = ssub.s32 %s19, %s38
    %s178 = ssub.s32 %s20, %s34
    %s179 = sor.u32 %s177, %s178
    %p180 = scmp.eq.s32.totalorder %s179, 0
    %s182 = sadd.s32 %s181, 1
    %s183 = scalar_select %p180, %s181, %s182
    %p186 = pneg %p180
    %p187 = scmp.eq.s32.totalorder %s12, 1
    %p188 = por %p186, %p187
    %p189 = scmp.ne.s32.totalorder %s181, %s184
    %p190 = scmp.eq.s32.totalorder %s12, 0
    %p191 = por %p189, %p190
    %p192 = scmp.ne.s32.totalorder %s181, %s184
    %p193 = scmp.eq.s32.totalorder %s17, 1
    %p194 = por %p192, %p193
    %p195 = scmp.ne.s32.totalorder %s184, %s185
    %p196 = scmp.eq.s32.totalorder %s17, 0
    %p197 = por %p195, %p196
    %p198 = scmp.ne.s32.totalorder %s184, %s185
    %p199 = scmp.eq.s32.totalorder %s18, 1
    %p200 = por %p198, %p199
    %p202 = scmp.ne.s32.totalorder %s185, %s201
    %p203 = scmp.eq.s32.totalorder %s18, 0
    %p204 = por %p202, %p203
    %p205 = scmp.le.s32.totalorder 1, %s12
    %p206 = scmp.lt.s32.totalorder %s12, 3
    %p207 = pnand %p205, %p206
    %p208 = pneg %p207
    // Predicated region
    $region9: #{conv_bn2_forward.2} parent=5 // pred_check
      _
    $region10: #{conv_bn2_forward.2} parent=5 // pred_check_branch
      %210 = sbr.rel (%p207) target = $region12
    $region11: #{conv_bn2_forward.2} parent=5 // pred_region
      %s211 = ssub.s32 %s12, 1
      // Predicated region
      $region13: #{conv_bn2_forward.2} parent=11 // pred_check
        %p212 = pneg %p87
      $region14: #{conv_bn2_forward.2} parent=11 // pred_check_branch
        %214 = sbr.rel (%p212) target = $region16
      $region15: #{conv_bn2_forward.2} parent=11 // pred_region
        %s215 = smul.u32 16, %s24
        %p216 = scmp.lt.s32.totalorder %s215, 15
        %s217 = scalar_select %p216, %s215, 15
        %p218 = scmp.lt.s32.totalorder %s23, 0
        %s219 = scalar_select %p218, %s23, 0
        %s220 = sadd.s32 %s219, %s217
        %s221 = smul.addr %s220, 4
        %s222 = scalar_lea.vmem %s1, %s221
        %s223 = smul.u32 16, %s24
      $region16: #{conv_bn2_forward.2} parent=11 // pred_fallthru
        _
      // Predicated region
      $region17: #{conv_bn2_forward.2} parent=11 // pred_check
        %p224 = pneg %p113
      $region18: #{conv_bn2_forward.2} parent=11 // pred_check_branch
        %226 = sbr.rel (%p224) target = $region20
      $region19: #{conv_bn2_forward.2} parent=11 // pred_region
        %p227 = scmp.lt.s32.totalorder %s23, 0
        %s228 = scalar_select %p227, %s23, 0
        %s229 = scalar_lea.vmem %s2, %s228
      $region20: #{conv_bn2_forward.2} parent=11 // pred_fallthru
        _
    $region12: #{conv_bn2_forward.2} parent=5 // pred_fallthru
      _
    %p230 = scmp.lt.s32.totalorder %s12, 2
    // Predicated region
    $region21: #{conv_bn2_forward.2} parent=5 // pred_check
      %p231 = pneg %p230
    $region22: #{conv_bn2_forward.2} parent=5 // pred_check_branch
      %233 = sbr.rel (%p231) target = $region24
    $region23: #{conv_bn2_forward.2} parent=5 // pred_region
      // Predicated region
      $region25: #{conv_bn2_forward.2} parent=23 // pred_check
        %p234 = pneg %p53
      $region26: #{conv_bn2_forward.2} parent=23 // pred_check_branch
        %236 = sbr.rel (%p234) target = $region28
      $region27: #{conv_bn2_forward.2} parent=23 // pred_region
        %s237 = smul.u32 8, %s19
        %p238 = scmp.lt.s32.totalorder %s237, 15
        %s239 = scalar_select %p238, %s237, 15
        %p240 = scmp.lt.s32.totalorder %s21, 0
        %s241 = scalar_select %p240, %s21, 0
        %s242 = sadd.s32 %s241, %s239
        %s243 = smul.addr %s242, 4
        %s244 = scalar_lea.vmem %s0, %s243
        %s245 = smul.u32 8, %s19
      $region28: #{conv_bn2_forward.2} parent=23 // pred_fallthru
        _
    $region24: #{conv_bn2_forward.2} parent=5 // pred_fallthru
      _
    %p246 = scmp.le.s32.totalorder 1, %s12
    %p247 = scmp.lt.s32.totalorder %s12, 3
    %p248 = pnand %p246, %p247
    %p249 = pneg %p248
    // Predicated region
    $region29: #{conv_bn2_forward.2} parent=5 // pred_check
      _
    $region30: #{conv_bn2_forward.2} parent=5 // pred_check_branch
      %251 = sbr.rel (%p248) target = $region32
    $region31: #{conv_bn2_forward.2} parent=5 // pred_region
      %s252 = ssub.s32 %s12, 1
      %s253 = smul.u32 8, %s22
      %p254 = scmp.lt.s32.totalorder %s253, 15
      %s255 = scalar_select %p254, %s253, 15
      %p256 = scmp.lt.s32.totalorder %s24, 0
      %s257 = scalar_select %p256, %s24, 0
      %s258 = sadd.s32 %s257, %s255
      %s259 = smul.addr %s258, 4
      %s260 = scalar_lea.vmem %s0, %s259
      %p261 = pneg %p59
      %p262 = pneg %p56
      %s263 = smul.u32 16, %s24
      %p264 = scmp.lt.s32.totalorder %s263, 15
      %s265 = scalar_select %p264, %s263, 15
      %p266 = scmp.lt.s32.totalorder %s23, 0
      %s267 = scalar_select %p266, %s23, 0
      %s268 = sadd.s32 %s267, %s265
      %s269 = smul.addr %s268, 4
      %s270 = scalar_lea.vmem %s1, %s269
      %p271 = pneg %p87
      %p272 = pneg %p84
      %p273 = scmp.lt.s32.totalorder %s23, 0
      %s274 = scalar_select %p273, %s23, 0
      %s275 = scalar_lea.vmem %s2, %s274
      %p276 = pneg %p113
      %p277 = pneg %p110
      %p278 = pneg %p141
      %p279 = pneg %p138
      %s280 = smul.u32 8, %s22
      %p281 = scmp.lt.s32.totalorder %s280, 15
      %s282 = scalar_select %p281, %s280, 15
      %p283 = scmp.lt.s32.totalorder %s23, 0
      %s284 = scalar_select %p283, %s23, 0
      %s285 = sadd.s32 %s284, %s282
      %s286 = smul.addr %s285, 4
      %s287 = scalar_lea.vmem %s3, %s286
      %p288 = pneg %p169
      %p289 = pneg %p166
      %p290 = scmp.lt.s32.totalorder %s22, 1
      %s291 = scalar_select %p290, %s22, 1
      %p292 = scmp.lt.s32.totalorder %s23, 0
      %s293 = scalar_select %p292, %s23, 0
      %s294 = sadd.s32 %s293, %s291
      %s295 = scalar_lea.vmem %s4, %s294
      %p296 = pneg %p197
      %p297 = pneg %p194
      %p298 = scmp.lt.s32.totalorder %s22, 1
      %s299 = scalar_select %p298, %s22, 1
      %p300 = scmp.lt.s32.totalorder %s23, 0
      %s301 = scalar_select %p300, %s23, 0
      %s302 = sadd.s32 %s301, %s299
      %s303 = scalar_lea.vmem %s5, %s302
      %s304 = smul.u32 8, %s22
      %p305 = scmp.lt.s32.totalorder %s304, 15
      %s306 = scalar_select %p305, %s304, 15
      %p307 = scmp.lt.s32.totalorder %s24, 0
      %s308 = scalar_select %p307, %s24, 0
      %s309 = sadd.s32 %s308, %s306
      %s310 = smul.addr %s309, 4
      %s311 = scalar_lea.vmem %s0, %s310
      %s312 = smul.u32 8, %s22
      %s313 = smul.u32 16, %s24
      %p314 = scmp.lt.s32.totalorder %s313, 15
      %s315 = scalar_select %p314, %s313, 15
      %p316 = scmp.lt.s32.totalorder %s23, 0
      %s317 = scalar_select %p316, %s23, 0
      %s318 = sadd.s32 %s317, %s315
      %s319 = smul.addr %s318, 4
      %s320 = scalar_lea.vmem %s1, %s319
      %s321 = smul.u32 16, %s24
      %p322 = scmp.lt.s32.totalorder %s23, 0
      %s323 = scalar_select %p322, %s23, 0
      %s324 = scalar_lea.vmem %s2, %s323
      %s325 = smul.u32 8, %s22
      %p326 = scmp.lt.s32.totalorder %s325, 15
      %s327 = scalar_select %p326, %s325, 15
      %p328 = scmp.lt.s32.totalorder %s23, 0
      %s329 = scalar_select %p328, %s23, 0
      %s330 = sadd.s32 %s329, %s327
      %s331 = smul.addr %s330, 4
      %s332 = scalar_lea.vmem %s3, %s331
      %s333 = smul.u32 8, %s22
      %p334 = scmp.lt.s32.totalorder %s22, 1
      %s335 = scalar_select %p334, %s22, 1
      %p336 = scmp.lt.s32.totalorder %s23, 0
      %s337 = scalar_select %p336, %s23, 0
      %s338 = sadd.s32 %s337, %s335
      %s339 = scalar_lea.vmem %s4, %s338
      %p340 = scmp.lt.s32.totalorder %s22, 1
      %s341 = scalar_select %p340, %s22, 1
      %p342 = scmp.lt.s32.totalorder %s23, 0
      %s343 = scalar_select %p342, %s23, 0
      %s344 = sadd.s32 %s343, %s341
      %s345 = scalar_lea.vmem %s5, %s344
      %p347 = scmp.eq.s32.totalorder %s24, 0
      // Predicated region
      $region33: #{conv_bn2_forward.2} parent=31 // pred_check
        %p348 = pneg %p347
      $region34: #{conv_bn2_forward.2} parent=31 // pred_check_branch
        %350 = sbr.rel (%p348) target = $region36
      $region35: #{conv_bn2_forward.2} parent=31 // pred_region
        %351 = vst [vmem:[#allocation2] sm:$0xff] 0.0
        %352 = vst [vmem:[#allocation2 + $0x8] sm:$0xff] 0.0
        %353 = vst [vmem:[#allocation2 + $0x10] sm:$0xff] 0.0
        %354 = vst [vmem:[#allocation2 + $0x18] sm:$0xff] 0.0
        %355 = vst [vmem:[#allocation2 + $0x20] sm:$0xff] 0.0
        %356 = vst [vmem:[#allocation2 + $0x28] sm:$0xff] 0.0
        %357 = vst [vmem:[#allocation2 + $0x30] sm:$0xff] 0.0
        %358 = vst [vmem:[#allocation2 + $0x38] sm:$0xff] 0.0
      $region36: #{conv_bn2_forward.2} parent=31 // pred_fallthru
        _
      %v359 = vld [vmem:[#allocation2] sm:$0xff]
      %v360 = vld [vmem:[#allocation2 + $0x8] sm:$0xff]
      %v361 = vld [vmem:[#allocation2 + $0x10] sm:$0xff]
      %v362 = vld [vmem:[#allocation2 + $0x18] sm:$0xff]
      %v363 = vld [vmem:[#allocation2 + $0x20] sm:$0xff]
      %v364 = vld [vmem:[#allocation2 + $0x28] sm:$0xff]
      %v365 = vld [vmem:[#allocation2 + $0x30] sm:$0xff]
      %v366 = vld [vmem:[#allocation2 + $0x38] sm:$0xff]
      %v367 = vld [vmem:[%s311] sm:$0xf]
      %v368 = vld [vmem:[%s311 + $0x4] sm:$0xf]
      %v369 = vld [vmem:[%s311 + $0x8] sm:$0xf]
      %v370 = vld [vmem:[%s311 + $0xc] sm:$0xf]
      %v371 = vld [vmem:[%s311 + $0x10] sm:$0xf]
      %v372 = vld [vmem:[%s311 + $0x14] sm:$0xf]
      %v373 = vld [vmem:[%s311 + $0x18] sm:$0xf]
      %v374 = vld [vmem:[%s311 + $0x1c] sm:$0xf]
      %v375 = vld [vmem:[%s320] sm:$0xf]
      %v376 = vld [vmem:[%s320 + $0x4] sm:$0xf]
      %v377 = vld [vmem:[%s320 + $0x8] sm:$0xf]
      %v378 = vld [vmem:[%s320 + $0xc] sm:$0xf]
      %v379 = vld [vmem:[%s320 + $0x10] sm:$0xf]
      %v380 = vld [vmem:[%s320 + $0x14] sm:$0xf]
      %v381 = vld [vmem:[%s320 + $0x18] sm:$0xf]
      %v382 = vld [vmem:[%s320 + $0x1c] sm:$0xf]
      %v383 = vld [vmem:[%s320 + $0x20] sm:$0xf]
      %v384 = vld [vmem:[%s320 + $0x24] sm:$0xf]
      %v385 = vld [vmem:[%s320 + $0x28] sm:$0xf]
      %v386 = vld [vmem:[%s320 + $0x2c] sm:$0xf]
      %v387 = vld [vmem:[%s320 + $0x30] sm:$0xf]
      %v388 = vld [vmem:[%s320 + $0x34] sm:$0xf]
      %v389 = vld [vmem:[%s320 + $0x38] sm:$0xf]
      %v390 = vld [vmem:[%s320 + $0x3c] sm:$0xf]
      %v399 = vunpack.c.l.b16 %v367
      %v400 = vunpack.c.l.b16 %v368
      %v401 = vunpack.c.l.b16 %v369
      %v402 = vunpack.c.l.b16 %v370
      %v403 = vunpack.c.l.b16 %v371
      %v404 = vunpack.c.l.b16 %v372
      %v405 = vunpack.c.l.b16 %v373
      %v406 = vunpack.c.l.b16 %v374
      %v407 = vpack.c.b16 %v400, %v399
      %v408 = vpack.c.b16 %v402, %v401
      %v409 = vpack.c.b16 %v404, %v403
      %v410 = vpack.c.b16 %v406, %v405
      %v431 = vunpack.c.l.b16 %v375
      %v432 = vunpack.c.l.b16 %v376
      %v433 = vunpack.c.l.b16 %v377
      %v434 = vunpack.c.l.b16 %v378
      %v435 = vunpack.c.l.b16 %v379
      %v436 = vunpack.c.l.b16 %v380
      %v437 = vunpack.c.l.b16 %v381
      %v438 = vunpack.c.l.b16 %v382
      %v439 = vunpack.c.l.b16 %v383
      %v440 = vunpack.c.l.b16 %v384
      %v441 = vunpack.c.l.b16 %v385
      %v442 = vunpack.c.l.b16 %v386
      %v443 = vunpack.c.l.b16 %v387
      %v444 = vunpack.c.l.b16 %v388
      %v445 = vunpack.c.l.b16 %v389
      %v446 = vunpack.c.l.b16 %v390
      %v447 = vpack.c.b16 %v432, %v431
      %v448 = vpack.c.b16 %v434, %v433
      %v449 = vpack.c.b16 %v436, %v435
      %v450 = vpack.c.b16 %v438, %v437
      %v451 = vpack.c.b16 %v440, %v439
      %v452 = vpack.c.b16 %v442, %v441
      %v453 = vpack.c.b16 %v444, %v443
      %v454 = vpack.c.b16 %v446, %v445
      %463 = vmatprep.subr.bf16.mxu0 0
      %464 = vmatpush1.bf16.msra.mxu0 %v447
      %465 = vmatprep.subr.bf16.mxu0 0
      %466 = vmatpush1.bf16.msra.mxu0 %v448
      %467 = vmatprep.subr.bf16.mxu0 0
      %468 = vmatpush1.bf16.msra.mxu0 %v449
      %469 = vmatprep.subr.bf16.mxu0 0
      %470 = vmatpush1.bf16.msra.mxu0 %v450
      %471 = vmatprep.subr.bf16.mxu0 0
      %472 = vmatpush1.bf16.msra.mxu0 %v451
      %473 = vmatprep.subr.bf16.mxu0 0
      %474 = vmatpush1.bf16.msra.mxu0 %v452
      %475 = vmatprep.subr.bf16.mxu0 0
      %476 = vmatpush1.bf16.msra.mxu0 %v453
      %477 = vmatprep.subr.bf16.mxu0 0
      %478 = vmatpush1.bf16.msra.mxu0 %v454
      %479 = vmatprep.subr.bf16.mxu0 0
      %480 = vmatpush1.bf16.msra.mxu0 0
      %481 = vmatprep.subr.bf16.mxu0 0
      %482 = vmatpush1.bf16.msra.mxu0 0
      %483 = vmatprep.subr.bf16.mxu0 0
      %484 = vmatpush1.bf16.msra.mxu0 0
      %485 = vmatprep.subr.bf16.mxu0 0
      %486 = vmatpush1.bf16.msra.mxu0 0
      %487 = vmatprep.subr.bf16.mxu0 0
      %488 = vmatpush1.bf16.msra.mxu0 0
      %489 = vmatprep.subr.bf16.mxu0 0
      %490 = vmatpush1.bf16.msra.mxu0 0
      %491 = vmatprep.subr.bf16.mxu0 0
      %492 = vmatpush1.bf16.msra.mxu0 0
      %493 = vmatprep.subr.bf16.mxu0 0
      %494 = vmatpush1.bf16.msra.mxu0 0
      %495 = vmatprep.mubr.bf16.mxu0 0
      %496 = vmatmul.mubr.bf16.gmra.mrb[0].mxu0 %v407
      %v497 = vpop.f32.mrb[0].mxu0
      %v498 = vadd.f32 0.0, %v497
      %v499 = vpop.f32.mrb[0].mxu0
      %v500 = vpop.f32.mrb[0].mxu0
      %v501 = vadd.f32 0.0, %v500
      %v502 = vpop.f32.mrb[0].mxu0
      %503 = vmatprep.mubr.bf16.mxu0 0
      %504 = vmatmul.mubr.bf16.gmra.mrb[0].mxu0 %v408
      %v505 = vpop.f32.mrb[0].mxu0
      %v506 = vadd.f32 0.0, %v505
      %v507 = vpop.f32.mrb[0].mxu0
      %v508 = vpop.f32.mrb[0].mxu0
      %v509 = vadd.f32 0.0, %v508
      %v510 = vpop.f32.mrb[0].mxu0
      %511 = vmatprep.mubr.bf16.mxu0 0
      %512 = vmatmul.mubr.bf16.gmra.mrb[0].mxu0 %v409
      %v513 = vpop.f32.mrb[0].mxu0
      %v514 = vadd.f32 0.0, %v513
      %v515 = vpop.f32.mrb[0].mxu0
      %v516 = vpop.f32.mrb[0].mxu0
      %v517 = vadd.f32 0.0, %v516
      %v518 = vpop.f32.mrb[0].mxu0
      %519 = vmatprep.mubr.bf16.mxu0 0
      %520 = vmatmul.mubr.bf16.gmra.mrb[0].mxu0 %v410
      %v521 = vpop.f32.mrb[0].mxu0
      %v522 = vadd.f32 0.0, %v521
      %v523 = vpop.f32.mrb[0].mxu0
      %v524 = vpop.f32.mrb[0].mxu0
      %v525 = vadd.f32 0.0, %v524
      %v526 = vpop.f32.mrb[0].mxu0
      %527 = vdwg.mxu0
      %v528 = vadd.f32 %v359, %v498
      %v529 = vadd.f32 %v360, %v501
      %v530 = vadd.f32 %v361, %v506
      %v531 = vadd.f32 %v362, %v509
      %v532 = vadd.f32 %v363, %v514
      %v533 = vadd.f32 %v364, %v517
      %v534 = vadd.f32 %v365, %v522
      %v535 = vadd.f32 %v366, %v525
      %536 = vst [vmem:[#allocation2] sm:$0xff] %v528
      %537 = vst [vmem:[#allocation2 + $0x8] sm:$0xff] %v529
      %538 = vst [vmem:[#allocation2 + $0x10] sm:$0xff] %v530
      %539 = vst [vmem:[#allocation2 + $0x18] sm:$0xff] %v531
      %540 = vst [vmem:[#allocation2 + $0x20] sm:$0xff] %v532
      %541 = vst [vmem:[#allocation2 + $0x28] sm:$0xff] %v533
      %542 = vst [vmem:[#allocation2 + $0x30] sm:$0xff] %v534
      %543 = vst [vmem:[#allocation2 + $0x38] sm:$0xff] %v535
      // Predicated region
      $region37: #{conv_bn2_forward.2} parent=31 // pred_check
        %p544 = pneg %p347
      $region38: #{conv_bn2_forward.2} parent=31 // pred_check_branch
        %546 = sbr.rel (%p544) target = $region40
      $region39: #{conv_bn2_forward.2} parent=31 // pred_region
        %v547 = vld [vmem:[#allocation2] sm:$0xff]
        %v548 = vld [vmem:[#allocation2 + $0x8] sm:$0xff]
        %v549 = vld [vmem:[#allocation2 + $0x10] sm:$0xff]
        %v550 = vld [vmem:[#allocation2 + $0x18] sm:$0xff]
        %v551 = vld [vmem:[#allocation2 + $0x20] sm:$0xff]
        %v552 = vld [vmem:[#allocation2 + $0x28] sm:$0xff]
        %v553 = vld [vmem:[#allocation2 + $0x30] sm:$0xff]
        %v554 = vld [vmem:[#allocation2 + $0x38] sm:$0xff]
        %v555 = vld [vmem:[%s324] sm:$0x1]
        %v557 = vlaneseq
        %v558 = vshrl.u32 %v557, 7
        %v559 = vsub.s32 0, %v558
        %v560 = vrot.slane %v555, %v559
        %v562 = vadd.f32 %v547, %v560
        %v563 = vadd.f32 %v548, %v560
        %v564 = vadd.f32 %v549, %v560
        %v565 = vadd.f32 %v550, %v560
        %v566 = vadd.f32 %v551, %v560
        %v567 = vadd.f32 %v552, %v560
        %v568 = vadd.f32 %v553, %v560
        %v569 = vadd.f32 %v554, %v560
        %v570 = vmax.f32 %v562, 0.0
        %v571 = vmax.f32 %v563, 0.0
        %v572 = vmax.f32 %v564, 0.0
        %v573 = vmax.f32 %v565, 0.0
        %v574 = vmax.f32 %v566, 0.0
        %v575 = vmax.f32 %v567, 0.0
        %v576 = vmax.f32 %v568, 0.0
        %v577 = vmax.f32 %v569, 0.0
        %v578 = vpack.c.bf16 %v571, %v570
        %v579 = vpack.c.bf16 %v573, %v572
        %v580 = vpack.c.bf16 %v575, %v574
        %v581 = vpack.c.bf16 %v577, %v576
        %v586 = vunpack.c.l.b16 %v578
        %v587 = vunpack.c.h.b16 %v578
        %v588 = vunpack.c.l.b16 %v579
        %v589 = vunpack.c.h.b16 %v579
        %v590 = vunpack.c.l.b16 %v580
        %v591 = vunpack.c.h.b16 %v580
        %v592 = vunpack.c.l.b16 %v581
        %v593 = vunpack.c.h.b16 %v581
        %v594 = vpack.c.b16 %v586, %v586
        %v595 = vpack.c.b16 %v587, %v587
        %v596 = vpack.c.b16 %v588, %v588
        %v597 = vpack.c.b16 %v589, %v589
        %v598 = vpack.c.b16 %v590, %v590
        %v599 = vpack.c.b16 %v591, %v591
        %v600 = vpack.c.b16 %v592, %v592
        %v601 = vpack.c.b16 %v593, %v593
        %610 = vst [vmem:[%s332] sm:$0xf] %v594
        %611 = vst [vmem:[%s332 + $0x4] sm:$0xf] %v595
        %612 = vst [vmem:[%s332 + $0x8] sm:$0xf] %v596
        %613 = vst [vmem:[%s332 + $0xc] sm:$0xf] %v597
        %614 = vst [vmem:[%s332 + $0x10] sm:$0xf] %v598
        %615 = vst [vmem:[%s332 + $0x14] sm:$0xf] %v599
        %616 = vst [vmem:[%s332 + $0x18] sm:$0xf] %v600
        %617 = vst [vmem:[%s332 + $0x1c] sm:$0xf] %v601
        %s618 = smul.u32 %s22, 64
        %v619 = vlaneseq
        %v620 = vshrl.u32 %v619, 7
        %v621 = vadd.s32 %v620, 8
        %v622 = vadd.s32 %v620, 16
        %v623 = vadd.s32 %v620, 24
        %v624 = vadd.s32 %v620, 32
        %v625 = vadd.s32 %v620, 40
        %v626 = vadd.s32 %v620, 48
        %v627 = vadd.s32 %v620, 56
        %v628 = vstv %s618
        %v629 = vadd.s32 %v628, %v620
        %v630 = vadd.s32 %v628, %v621
        %v631 = vadd.s32 %v628, %v622
        %v632 = vadd.s32 %v628, %v623
        %v633 = vadd.s32 %v628, %v624
        %v634 = vadd.s32 %v628, %v625
        %v635 = vadd.s32 %v628, %v626
        %v636 = vadd.s32 %v628, %v627
        %vm637 = vcmp.lt.s32.totalorder %v629, 128
        %vm638 = vcmp.lt.s32.totalorder %v630, 128
        %vm639 = vcmp.lt.s32.totalorder %v631, 128
        %vm640 = vcmp.lt.s32.totalorder %v632, 128
        %vm641 = vcmp.lt.s32.totalorder %v633, 128
        %vm642 = vcmp.lt.s32.totalorder %v634, 128
        %vm643 = vcmp.lt.s32.totalorder %v635, 128
        %vm644 = vcmp.lt.s32.totalorder %v636, 128
        %v645 = vsel %vm637, 1, 0
        %v646 = vsel %vm638, 1, 0
        %v647 = vsel %vm639, 1, 0
        %v648 = vsel %vm640, 1, 0
        %v649 = vsel %vm641, 1, 0
        %v650 = vsel %vm642, 1, 0
        %v651 = vsel %vm643, 1, 0
        %v652 = vsel %vm644, 1, 0
        %v653 = vcvt.s32.f32 %v645
        %v654 = vcvt.s32.f32 %v646
        %v655 = vcvt.s32.f32 %v647
        %v656 = vcvt.s32.f32 %v648
        %v657 = vcvt.s32.f32 %v649
        %v658 = vcvt.s32.f32 %v650
        %v659 = vcvt.s32.f32 %v651
        %v660 = vcvt.s32.f32 %v652
        %v661 = vmul.f32 %v570, %v653
        %v662 = vmul.f32 %v571, %v654
        %v663 = vmul.f32 %v572, %v655
        %v664 = vmul.f32 %v573, %v656
        %v665 = vmul.f32 %v574, %v657
        %v666 = vmul.f32 %v575, %v658
        %v667 = vmul.f32 %v576, %v659
        %v668 = vmul.f32 %v577, %v660
        %v669 = vadd.f32 %v661, %v662
        %v670 = vadd.f32 %v669, %v663
        %v671 = vadd.f32 %v670, %v664
        %v672 = vadd.f32 %v671, %v665
        %v673 = vadd.f32 %v672, %v666
        %v674 = vadd.f32 %v673, %v667
        %v675 = vadd.f32 %v674, %v668
        %v676 = vrot.slane %v675, 4
        %v677 = vadd.f32 %v675, %v676
        %v678 = vrot.slane %v677, 2
        %v679 = vadd.f32 %v677, %v678
        %v680 = vrot.slane %v679, 1
        %v681 = vadd.f32 %v679, %v680
        %682 = vst [vmem:[%s339] sm:$0x1] %v681
        %v683 = vmul.f32 %v661, %v661
        %v684 = vmul.f32 %v662, %v662
        %v685 = vmul.f32 %v663, %v663
        %v686 = vmul.f32 %v664, %v664
        %v687 = vmul.f32 %v665, %v665
        %v688 = vmul.f32 %v666, %v666
        %v689 = vmul.f32 %v667, %v667
        %v690 = vmul.f32 %v668, %v668
        %v691 = vadd.f32 %v683, %v684
        %v692 = vadd.f32 %v691, %v685
        %v693 = vadd.f32 %v692, %v686
        %v694 = vadd.f32 %v693, %v687
        %v695 = vadd.f32 %v694, %v688
        %v696 = vadd.f32 %v695, %v689
        %v697 = vadd.f32 %v696, %v690
        %v698 = vrot.slane %v697, 4
        %v699 = vadd.f32 %v697, %v698
        %v700 = vrot.slane %v699, 2
        %v701 = vadd.f32 %v699, %v700
        %v702 = vrot.slane %v701, 1
        %v703 = vadd.f32 %v701, %v702
        %704 = vst [vmem:[%s345] sm:$0x1] %v703
      $region40: #{conv_bn2_forward.2} parent=31 // pred_fallthru
        _
      %s705 = smul.u32 8, %s22
      %p706 = scmp.lt.s32.totalorder %s705, 15
      %s707 = scalar_select %p706, %s705, 15
      %p708 = scmp.lt.s32.totalorder %s23, 0
      %s709 = scalar_select %p708, %s23, 0
      %s710 = sadd.s32 %s709, %s707
      %s711 = smul.addr %s710, 4
      %s712 = scalar_lea.vmem %s3, %s711
      %p713 = scmp.lt.s32.totalorder %s22, 1
      %s714 = scalar_select %p713, %s22, 1
      %p715 = scmp.lt.s32.totalorder %s23, 0
      %s716 = scalar_select %p715, %s23, 0
      %s717 = sadd.s32 %s716, %s714
      %s718 = scalar_lea.vmem %s4, %s717
      %p719 = scmp.lt.s32.totalorder %s22, 1
      %s720 = scalar_select %p719, %s22, 1
      %p721 = scmp.lt.s32.totalorder %s23, 0
      %s722 = scalar_select %p721, %s23, 0
      %s723 = sadd.s32 %s722, %s720
      %s724 = scalar_lea.vmem %s5, %s723
      // Predicated region
      $region41: #{conv_bn2_forward.2} parent=31 // pred_check
        %p725 = pneg %p138
      $region42: #{conv_bn2_forward.2} parent=31 // pred_check_branch
        %727 = sbr.rel (%p725) target = $region44
      $region43: #{conv_bn2_forward.2} parent=31 // pred_region
        %s728 = smul.u32 8, %s22
      $region44: #{conv_bn2_forward.2} parent=31 // pred_fallthru
        _
      // Predicated region
      $region45: #{conv_bn2_forward.2} parent=31 // pred_check
        %p729 = pneg %p166
      $region46: #{conv_bn2_forward.2} parent=31 // pred_check_branch
        %731 = sbr.rel (%p729) target = $region48
      $region47: #{conv_bn2_forward.2} parent=31 // pred_region
        _
      $region48: #{conv_bn2_forward.2} parent=31 // pred_fallthru
        _
      // Predicated region
      $region49: #{conv_bn2_forward.2} parent=31 // pred_check
        %p732 = pneg %p194
      $region50: #{conv_bn2_forward.2} parent=31 // pred_check_branch
        %734 = sbr.rel (%p732) target = $region52
      $region51: #{conv_bn2_forward.2} parent=31 // pred_region
        _
      $region52: #{conv_bn2_forward.2} parent=31 // pred_fallthru
        _
    $region32: #{conv_bn2_forward.2} parent=5 // pred_fallthru
      _
    %p735 = scmp.le.s32.totalorder 2, %s12
    // Predicated region
    $region53: #{conv_bn2_forward.2} parent=5 // pred_check
      %p736 = pneg %p735
    $region54: #{conv_bn2_forward.2} parent=5 // pred_check_branch
      %738 = sbr.rel (%p736) target = $region56
    $region55: #{conv_bn2_forward.2} parent=5 // pred_region
      %s739 = ssub.s32 %s12, 2
      // Predicated region
      $region57: #{conv_bn2_forward.2} parent=55 // pred_check
        %p740 = pneg %p144
      $region58: #{conv_bn2_forward.2} parent=55 // pred_check_branch
        %742 = sbr.rel (%p740) target = $region60
      $region59: #{conv_bn2_forward.2} parent=55 // pred_region
        %s743 = smul.u32 8, %s25
        %p744 = scmp.lt.s32.totalorder %s743, 15
        %s745 = scalar_select %p744, %s743, 15
        %p746 = scmp.lt.s32.totalorder %s26, 0
        %s747 = scalar_select %p746, %s26, 0
        %s748 = sadd.s32 %s747, %s745
        %s749 = smul.addr %s748, 4
        %s750 = scalar_lea.vmem %s3, %s749
      $region60: #{conv_bn2_forward.2} parent=55 // pred_fallthru
        _
      // Predicated region
      $region61: #{conv_bn2_forward.2} parent=55 // pred_check
        %p751 = pneg %p172
      $region62: #{conv_bn2_forward.2} parent=55 // pred_check_branch
        %753 = sbr.rel (%p751) target = $region64
      $region63: #{conv_bn2_forward.2} parent=55 // pred_region
        %p754 = scmp.lt.s32.totalorder %s25, 1
        %s755 = scalar_select %p754, %s25, 1
        %p756 = scmp.lt.s32.totalorder %s26, 0
        %s757 = scalar_select %p756, %s26, 0
        %s758 = sadd.s32 %s757, %s755
        %s759 = scalar_lea.vmem %s4, %s758
      $region64: #{conv_bn2_forward.2} parent=55 // pred_fallthru
        _
      // Predicated region
      $region65: #{conv_bn2_forward.2} parent=55 // pred_check
        %p760 = pneg %p200
      $region66: #{conv_bn2_forward.2} parent=55 // pred_check_branch
        %762 = sbr.rel (%p760) target = $region68
      $region67: #{conv_bn2_forward.2} parent=55 // pred_region
        %p763 = scmp.lt.s32.totalorder %s25, 1
        %s764 = scalar_select %p763, %s25, 1
        %p765 = scmp.lt.s32.totalorder %s26, 0
        %s766 = scalar_select %p765, %s26, 0
        %s767 = sadd.s32 %s766, %s764
        %s768 = scalar_lea.vmem %s5, %s767
      $region68: #{conv_bn2_forward.2} parent=55 // pred_fallthru
        _
    $region56: #{conv_bn2_forward.2} parent=5 // pred_fallthru
      _
  $region6: #{conv_bn2_forward.2} parent=0 // loop_footer
    %s16 = sadd.s32 1, %s12
  $region7: #{conv_bn2_forward.2} parent=0 // loop_footer_branch
    %11 = sbr.rel target = $region3
  $region8: #{conv_bn2_forward.2} parent=0 // loop_exit
    _

</llo_original>
